<compile_context>
chip_gen: v6e
topology: v6e:2x2x1
jax: 0.10.0
libtpu: 0.0.40
codegen_flags: <defaults>
</compile_context>

<pallas_src>
import math
import functools

import jax
import jax.numpy as jnp
from jax.experimental import pallas as pl
from jax.experimental.pallas import tpu as pltpu


# --------------------------------------------------------------------------
# Kernels
# --------------------------------------------------------------------------
def _fc_relu_single_k_kernel(x_ref, w_ref, b_ref, o_ref):
    # Whole reduction fits one tile: no accumulator scratch, no pl.when.
    y = jnp.dot(x_ref[...], w_ref[...], preferred_element_type=jnp.float32)
    y = y + b_ref[...]                      # (1, tn) f32 bias, broadcast over rows
    o_ref[...] = jnp.maximum(y, 0.0).astype(o_ref.dtype)


def _fc_relu_multi_k_kernel(x_ref, w_ref, b_ref, o_ref, acc_ref):
    # x:(tm,tk)  w:(tk,tn)  b:(1,tn) f32  o:(tm,tn)  acc:(tm,tn) f32 scratch.
    k = pl.program_id(2)

    @pl.when(k == 0)
    def _():
        # Fold the bias into the accumulator init instead of the epilogue.
        acc_ref[...] = jnp.broadcast_to(b_ref[...], acc_ref.shape)

    acc_ref[...] += jnp.dot(
        x_ref[...], w_ref[...], preferred_element_type=jnp.float32
    )

    @pl.when(k == pl.num_programs(2) - 1)
    def _():
        o_ref[...] = jnp.maximum(acc_ref[...], 0.0).astype(o_ref.dtype)


# --------------------------------------------------------------------------
# Helpers
# --------------------------------------------------------------------------
def _round_up(x, m):
    return ((x + m - 1) // m) * m


def _tpu_vmem_bytes():
    """Physical VMEM per TensorCore; conservative 64 MiB fallback (v7x)."""
    try:
        info = pltpu.get_tpu_info()
        for attr in ("vmem_capacity_bytes", "vmem_bytes", "vmem_size_bytes"):
            v = getattr(info, attr, None)
            if v:
                return int(v)
    except Exception:
        pass
    return 64 * 1024 * 1024


def _pick_kn_tiles(in_features, out_features, compute_dtype,
                   max_tk=2048, max_tn=1024):
    """Lane-aligned (tk, tn), shrunk until a double-buffered pipeline fits."""
    itemsize = jnp.dtype(compute_dtype).itemsize
    budget = int(min(0.6 * _tpu_vmem_bytes(), 40 * 2**20))
    tk = min(max_tk, _round_up(in_features, 128))
    tn = min(max_tn, _round_up(out_features, 128))
    tm_assumed = 256  # worst-case batch tile used only for budgeting

    def footprint(tk_, tn_):
        return (2 * tm_assumed * tk_ * itemsize      # x  (double-buffered)
                + 2 * tk_ * tn_ * itemsize           # weight
                + 2 * tn_ * 4                        # bias (f32)
                + 2 * tm_assumed * tn_ * 4           # output (worst-case f32)
                + tm_assumed * tn_ * 4)              # f32 accumulator scratch

    while footprint(tk, tn) > budget and (tk > 128 or tn > 128):
        if tk >= tn and tk > 128:
            tk = max(128, (tk // 2) // 128 * 128)
        elif tn > 128:
            tn = max(128, (tn // 2) // 128 * 128)
        else:
            break
    return tk, tn


# --------------------------------------------------------------------------
# Forward (jitted impl + pytree-friendly wrapper)
# --------------------------------------------------------------------------
@functools.partial(jax.jit, static_argnames=("out_features", "tk", "tn"))
def _fc_layer_impl(x, weight_t, bias2d, *, out_features, tk, tn):
    B, K = x.shape
    Kp, Np = weight_t.shape
    assert K <= Kp and out_features <= Np
    out_dtype = x.dtype
    compute_dtype = weight_t.dtype
    itemsize = jnp.dtype(compute_dtype).itemsize

    # Sublane-packed batch tile (8 rows f32, 16 bf16, 32 int8/fp8).
    sub = {4: 8, 2: 16, 1: 32}.get(itemsize, 8)
    tm = min(256, _round_up(B, sub))
    Bp = _round_up(B, tm)

    x = x.astype(compute_dtype)
    if (Bp, Kp) != (B, K):
        x = jnp.pad(x, ((0, Bp - B), (0, Kp - K)))  # zeros are matmul-neutral

    gi, gj, gk = Bp // tm, Np // tn, Kp // tk

    # v7x has 2 TensorCores: guarantee >=2 parallel (i, j) blocks when possible.
    tn_eff = tn
    if gi * gj == 1 and tn >= 256 and (tn // 2) % 128 == 0:
        tn_eff = tn // 2
        gj = Np // tn_eff

    cost = pl.CostEstimate(
        flops=2 * Bp * Kp * Np,
        transcendentals=0,
        bytes_accessed=(Bp * Kp * itemsize * gj            # x streamed once per j
                        + Kp * Np * itemsize * gi          # w streamed once per i
                        + Np * 4 * gi                      # bias
                        + Bp * Np * jnp.dtype(out_dtype).itemsize),
    )

    vmem_phys = _tpu_vmem_bytes()
    compiler_kwargs = dict(
        vmem_limit_bytes=int(min(0.75 * vmem_phys, 100 * 2**20)))

    if gk == 1:
        # Single reduction step: no accumulator scratch, no init/finalize.
        out_padded = pl.pallas_call(
            _fc_relu_single_k_kernel,
            out_shape=jax.ShapeDtypeStruct((Bp, Np), out_dtype),
            grid_spec=pltpu.PrefetchScalarGridSpec(
                num_scalar_prefetch=0,
                grid=(gi, gj),
                in_specs=[
                    pl.BlockSpec((tm, Kp), lambda i, j: (i, 0)),       # x
                    pl.BlockSpec((Kp, tn_eff), lambda i, j: (0, j)),   # weight_t
                    pl.BlockSpec((1, tn_eff), lambda i, j: (0, j)),    # bias
                ],
                out_specs=pl.BlockSpec((tm, tn_eff), lambda i, j: (i, j)),
            ),
            compiler_params=pltpu.CompilerParams(
                dimension_semantics=("parallel", "parallel"),
                **compiler_kwargs),
            cost_estimate=cost,
        )(x, weight_t, bias2d)
    else:
        out_padded = pl.pallas_call(
            _fc_relu_multi_k_kernel,
            out_shape=jax.ShapeDtypeStruct((Bp, Np), out_dtype),
            grid_spec=pltpu.PrefetchScalarGridSpec(
                num_scalar_prefetch=0,
                grid=(gi, gj, gk),
                in_specs=[
                    pl.BlockSpec((tm, tk), lambda i, j, k: (i, k)),       # x
                    pl.BlockSpec((tk, tn_eff), lambda i, j, k: (k, j)),   # weight_t
                    pl.BlockSpec((1, tn_eff), lambda i, j, k: (0, j)),    # bias
                ],
                out_specs=pl.BlockSpec((tm, tn_eff), lambda i, j, k: (i, j)),
                scratch_shapes=[pltpu.VMEM((tm, tn_eff), jnp.float32)],
            ),
            compiler_params=pltpu.CompilerParams(
                dimension_semantics=("parallel", "parallel", "arbitrary"),
                **compiler_kwargs),
            cost_estimate=cost,
        )(x, weight_t, bias2d)

    return out_padded[:B, :out_features]


def fc_layer(params, x):
    """relu(x @ W.T + b) — FCLayer.forward.  Supports leading batch dims."""
    in_features = params["in_features"]
    out_features = params["out_features"]
    assert x.shape[-1] == in_features, "in_features mismatch"
    lead = x.shape[:-1]
    x2d = x.reshape((-1, in_features))
    y = _fc_layer_impl(
        x2d, params["weight_t"], params["bias"],
        out_features=out_features, tk=params["tk"], tn=params["tn"])
    return y.reshape(lead + (out_features,))


# --------------------------------------------------------------------------
# Params: nn.Linear default init; weight pre-transposed, pre-padded, pre-cast.
# --------------------------------------------------------------------------
def init_fc_params(key, in_features, out_features, *,
                   compute_dtype=jnp.bfloat16, max_tk=2048, max_tn=1024):
    k_w, k_b = jax.random.split(key)
    bound = 1.0 / math.sqrt(in_features)
    weight = jax.random.uniform(
        k_w, (out_features, in_features), jnp.float32, -bound, bound)
    bias = jax.random.uniform(
        k_b, (out_features,), jnp.float32, -bound, bound)

    tk, tn = _pick_kn_tiles(in_features, out_features, compute_dtype,
                            max_tk=max_tk, max_tn=max_tn)
    Kp = _round_up(in_features, tk)
    Np = _round_up(out_features, tn)

    # Pre-transpose / pre-cast / pre-pad ONCE so the forward pays no weight
    # round-trip.  Bias stays f32 (accumulation dtype).
    weight_t = weight.T.astype(compute_dtype)
    if (Kp, Np) != (in_features, out_features):
        weight_t = jnp.pad(
            weight_t, ((0, Kp - in_features), (0, Np - out_features)))
    bias2d = bias.reshape(1, out_features).astype(jnp.float32)
    if Np != out_features:
        bias2d = jnp.pad(bias2d, ((0, 0), (0, Np - out_features)))

    return {"weight_t": weight_t, "bias": bias2d,
            "in_features": in_features, "out_features": out_features,
            "tk": tk, "tn": tn}


# --------------------------------------------------------------------------
# Demo / correctness check
# --------------------------------------------------------------------------
if __name__ == "__main__":
    key = jax.random.PRNGKey(0)
    k_x, k_p = jax.random.split(key)

    batch, in_features, out_features = 8, 32, 64
    x = jax.random.normal(k_x, (batch, in_features), jnp.float32)

    # --- f32 path (single-K-step fast-path kernel), tight tolerance ---------
    params_f32 = init_fc_params(k_p, in_features, out_features,
                                compute_dtype=jnp.float32)
    out = jax.block_until_ready(fc_layer(params_f32, x))
    w_f32 = params_f32["weight_t"][:in_features, :out_features]
    b_f32 = params_f32["bias"][0, :out_features]
    ref = jnp.maximum(
        jnp.dot(x, w_f32, precision=jax.lax.Precision.HIGHEST) + b_f32, 0.0)
    assert out.shape == (batch, out_features)
    assert jnp.allclose(out, ref, atol=1e-4, rtol=1e-4)

    # --- bf16-operand default path (f32 accumulation), loose tolerance ------
    params_bf16 = init_fc_params(k_p, in_features, out_features)   # bf16 default
    out_bf = jax.block_until_ready(fc_layer(params_bf16, x))
    w_bf = params_bf16["weight_t"][:in_features, :out_features].astype(jnp.float32)
    ref_bf = jnp.maximum(
        jnp.dot(x, w_bf, precision=jax.lax.Precision.HIGHEST) + b_f32, 0.0)
    assert jnp.allclose(out_bf, ref_bf, atol=5e-2, rtol=5e-2)

    # --- multi-K accumulator path (small shapes, tk forced to 128) ----------
    b2, inf2, outf2 = 16, 256, 192
    x2 = jax.random.normal(jax.random.PRNGKey(1), (b2, inf2), jnp.float32)
    params_mk = init_fc_params(jax.random.PRNGKey(2), inf2, outf2,
                               compute_dtype=jnp.float32, max_tk=128)
    out2 = jax.block_until_ready(fc_layer(params_mk, x2))
    w2 = params_mk["weight_t"][:inf2, :outf2]
    bb2 = params_mk["bias"][0, :outf2]
    ref2 = jnp.maximum(
        jnp.dot(x2, w2, precision=jax.lax.Precision.HIGHEST) + bb2, 0.0)
    assert jnp.allclose(out2, ref2, atol=1e-4, rtol=1e-4)

    print("KERNEL_OK")
</pallas_src>

<mosaic_0001>
module attributes {stable_mosaic.version = 11 : i64} {
  func.func @_fc_relu_single_k_kernel(%arg0: i32, %arg1: i32, %arg2: memref<8x128xf32, #tpu.memory_space<vmem>>, %arg3: memref<128x128xf32, #tpu.memory_space<vmem>>, %arg4: memref<1x128xf32, #tpu.memory_space<vmem>>, %arg5: memref<8x128xf32, #tpu.memory_space<vmem>>) attributes {dimension_semantics = [#tpu.dimension_semantics<parallel>, #tpu.dimension_semantics<parallel>], iteration_bounds = array<i64: 1, 1>, scalar_prefetch = 0 : i64, scratch_operands = 0 : i64, tpu.core_type = #tpu.core_type<tc>, window_params = [{transform_indices = @transform_0, window_bounds = array<i64: 8, 128>}, {transform_indices = @transform_1, window_bounds = array<i64: 128, 128>}, {transform_indices = @transform_2, window_bounds = array<i64: 1, 128>}, {transform_indices = @transform_3, window_bounds = array<i64: 8, 128>}]} {
    %c0 = arith.constant 0 : index
    %c0_0 = arith.constant 0 : index
    %0 = vector.load %arg2[%c0, %c0_0] : memref<8x128xf32, #tpu.memory_space<vmem>>, vector<8x128xf32>
    %c0_1 = arith.constant 0 : index
    %c0_2 = arith.constant 0 : index
    %1 = vector.load %arg3[%c0_1, %c0_2] : memref<128x128xf32, #tpu.memory_space<vmem>>, vector<128x128xf32>
    %cst = arith.constant dense<0.000000e+00> : vector<8x128xf32>
    %2 = tpu.matmul %0, %1, %cst {dimension_numbers = #tpu.dot_dimension_numbers<[1], [0], [0], [1], [0, 0, 1, 1], [], []>} : vector<8x128xf32>, vector<128x128xf32>, vector<8x128xf32> -> vector<8x128xf32>
    %c0_3 = arith.constant 0 : index
    %c0_4 = arith.constant 0 : index
    %3 = vector.load %arg4[%c0_3, %c0_4] : memref<1x128xf32, #tpu.memory_space<vmem>>, vector<1x128xf32>
    %4 = vector.broadcast %3 : vector<1x128xf32> to vector<8x128xf32>
    %5 = arith.addf %2, %4 : vector<8x128xf32>
    %cst_5 = arith.constant 0.000000e+00 : f32
    %6 = vector.broadcast %cst_5 : f32 to vector<8x128xf32>
    %7 = arith.maximumf %5, %6 : vector<8x128xf32>
    %c0_6 = arith.constant 0 : index
    %c0_7 = arith.constant 0 : index
    %8 = vector.load %arg5[%c0_6, %c0_7] : memref<8x128xf32, #tpu.memory_space<vmem>>, vector<8x128xf32>
    tpu.vector_store %arg5[%c0_6, %c0_7], %7 {strides = array<i32>} : memref<8x128xf32, #tpu.memory_space<vmem>>, vector<8x128xf32>,
    return
  }
  func.func @transform_0(%arg0: i32, %arg1: i32) -> (i32, i32) {
    %c0_i32 = arith.constant 0 : i32
    %c0_i32_0 = arith.constant 0 : i32
    return %arg0, %c0_i32 : i32, i32
  }
  func.func @transform_1(%arg0: i32, %arg1: i32) -> (i32, i32) {
    %c0_i32 = arith.constant 0 : i32
    %c0_i32_0 = arith.constant 0 : i32
    return %c0_i32, %arg1 : i32, i32
  }
  func.func @transform_2(%arg0: i32, %arg1: i32) -> (i32, i32) {
    %c0_i32 = arith.constant 0 : i32
    %c0_i32_0 = arith.constant 0 : i32
    return %c0_i32, %arg1 : i32, i32
  }
  func.func @transform_3(%arg0: i32, %arg1: i32) -> (i32, i32) {
    %c0_i32 = arith.constant 0 : i32
    return %arg0, %arg1 : i32, i32
  }
}

</mosaic_0001>

<llo_original>
// kernel: _fc_layer_impl.1
$region0: #{_fc_layer_impl.1}
  #allocation0 [shape = 'u32[]', space=smem, size = 0x4, offset = 0x4, fixed_abs, tag = 'smem constant byte address 0x4 - core index']
  #allocation1 [shape = 'u32[144,128]{1,0:T(1,128)}', space=vmem, size = 0x12000, scoped, tag = 'internal scratch']
  %s0 = inlined_call_operand.vmem [shape: f32[8,128], index: 0, kind: input, shape index: {}]
  %s1 = inlined_call_operand.hbm [shape: f32[128,128], index: 1, kind: input, shape index: {}]
  %s2 = inlined_call_operand.vmem [shape: f32[1,128], index: 2, kind: input, shape index: {}]
  %s3 = inlined_call_operand.hbm [shape: f32[8,128], index: 3, kind: output, shape index: {}]
  %s4 = sld [smem:[#allocation0]]
  $region26: #{_fc_layer_impl.1} parent=0
    _
  %s6 = ssub.s32 1, %s4
  %s7 = scalar_select 0, %s6, %s4
  $region1: #{_fc_layer_impl.1} parent=0
    #allocation2 [shape = 'u8[65536]{0}', space=vmem, size = 0x10000, scoped, tag = 'input window, operand 1, single buffered']
    #allocation3 [shape = 's32[1]{0}', space=sflag, size = 0x4, scoped, tag = 'scoped memory for _fc_layer_impl.1']
    #allocation4 [shape = 's32[1]{0}', space=sflag, size = 0x4, scoped, tag = 'scoped memory for _fc_layer_impl.1']
    #allocation5 [shape = 'u8[4096]{0}', space=vmem, size = 0x1000, scoped, tag = 'output window, operand 0, single buffered']
    %8 = vsyncpa [#allocation3], 0
    %9 = vsyncpa [#allocation4], 0
    // Predicated region
    $region2: #{_fc_layer_impl.1} parent=1 // pred_check
      _
    $region3: #{_fc_layer_impl.1} parent=1 // pred_check_branch
      %11 = sbr.rel (0) target = $region5
    $region4: #{_fc_layer_impl.1} parent=1 // pred_region
      _
    $region5: #{_fc_layer_impl.1} parent=1 // pred_fallthru
      _
    // Predicated region
    $region6: #{_fc_layer_impl.1} parent=1 // pred_check
      _
    $region7: #{_fc_layer_impl.1} parent=1 // pred_check_branch
      %13 = sbr.rel (0) target = $region9
    $region8: #{_fc_layer_impl.1} parent=1 // pred_region
      %s15 = ssub.s32 2048, 2048
      %16 = vsyncadd [#allocation3], %s15
      %s17 = sshll.u32 [#allocation2], 4
      %s18 = int_to_ptr.vmem [resolvable:$true] %s17
      %23 = dma.hbm_to_vmem [thread:$0]  %s1, 2048, %s18, [#allocation3], 128, 128, 8
    $region9: #{_fc_layer_impl.1} parent=1 // pred_fallthru
      _
    // Predicated region
    $region10: #{_fc_layer_impl.1} parent=1 // pred_check
      _
    $region11: #{_fc_layer_impl.1} parent=1 // pred_check_branch
      %25 = sbr.rel (0) target = $region13
    $region12: #{_fc_layer_impl.1} parent=1 // pred_region
      _
    $region13: #{_fc_layer_impl.1} parent=1 // pred_fallthru
      _
    // Predicated region
    $region14: #{_fc_layer_impl.1} parent=1 // pred_check
      _
    $region15: #{_fc_layer_impl.1} parent=1 // pred_check_branch
      %27 = sbr.rel (0) target = $region17
    $region16: #{_fc_layer_impl.1} parent=1 // pred_region
      %28 = dma.done [#allocation3], 2048
    $region17: #{_fc_layer_impl.1} parent=1 // pred_fallthru
      _
    %v29 = vld [vmem:[%s0] sm:$0xff]
    %v30 = vld [vmem:[#allocation2] sm:$0xff]
    %v31 = vld [vmem:[#allocation2 + $0x8] sm:$0xff]
    %v32 = vld [vmem:[#allocation2 + $0x10] sm:$0xff]
    %v33 = vld [vmem:[#allocation2 + $0x18] sm:$0xff]
    %v34 = vld [vmem:[#allocation2 + $0x20] sm:$0xff]
    %v35 = vld [vmem:[#allocation2 + $0x28] sm:$0xff]
    %v36 = vld [vmem:[#allocation2 + $0x30] sm:$0xff]
    %v37 = vld [vmem:[#allocation2 + $0x38] sm:$0xff]
    %v38 = vld [vmem:[#allocation2 + $0x40] sm:$0xff]
    %v39 = vld [vmem:[#allocation2 + $0x48] sm:$0xff]
    %v40 = vld [vmem:[#allocation2 + $0x50] sm:$0xff]
    %v41 = vld [vmem:[#allocation2 + $0x58] sm:$0xff]
    %v42 = vld [vmem:[#allocation2 + $0x60] sm:$0xff]
    %v43 = vld [vmem:[#allocation2 + $0x68] sm:$0xff]
    %v44 = vld [vmem:[#allocation2 + $0x70] sm:$0xff]
    %v45 = vld [vmem:[#allocation2 + $0x78] sm:$0xff]
    %v46 = vld [vmem:[%s2] sm:$0x1]
    %v48 = vlaneseq
    %v49 = vshrl.u32 %v48, 7
    %v50 = vsub.s32 0, %v49
    %v51 = vrot.slane %v46, %v50
    %53 = vmatprep.subr.mxu0 0.0
    %54 = vmatpush1.msra.mxu0 %v45
    %55 = vmatprep.subr.mxu0 0.0
    %56 = vmatpush1.msra.mxu0 %v44
    %57 = vmatprep.subr.mxu0 0.0
    %58 = vmatpush1.msra.mxu0 %v43
    %59 = vmatprep.subr.mxu0 0.0
    %60 = vmatpush1.msra.mxu0 %v42
    %61 = vmatprep.subr.mxu0 0.0
    %62 = vmatpush1.msra.mxu0 %v41
    %63 = vmatprep.subr.mxu0 0.0
    %64 = vmatpush1.msra.mxu0 %v40
    %65 = vmatprep.subr.mxu0 0.0
    %66 = vmatpush1.msra.mxu0 %v39
    %67 = vmatprep.subr.mxu0 0.0
    %68 = vmatpush1.msra.mxu0 %v38
    %69 = vmatprep.subr.mxu0 0.0
    %70 = vmatpush1.msra.mxu0 %v37
    %71 = vmatprep.subr.mxu0 0.0
    %72 = vmatpush1.msra.mxu0 %v36
    %73 = vmatprep.subr.mxu0 0.0
    %74 = vmatpush1.msra.mxu0 %v35
    %75 = vmatprep.subr.mxu0 0.0
    %76 = vmatpush1.msra.mxu0 %v34
    %77 = vmatprep.subr.mxu0 0.0
    %78 = vmatpush1.msra.mxu0 %v33
    %79 = vmatprep.subr.mxu0 0.0
    %80 = vmatpush1.msra.mxu0 %v32
    %81 = vmatprep.subr.mxu0 0.0
    %82 = vmatpush1.msra.mxu0 %v31
    %83 = vmatprep.subr.mxu0 0.0
    %84 = vmatpush1.msra.mxu0 %v30
    %85 = vmatprep.subr.mxu0 0.0
    %86 = vmatpush2.msra.mxu0 0.0
    %87 = vmatprep.subr.mxu0 0.0
    %88 = vmatpush2.msra.mxu0 0.0
    %89 = vmatprep.subr.mxu0 0.0
    %90 = vmatpush2.msra.mxu0 0.0
    %91 = vmatprep.subr.mxu0 0.0
    %92 = vmatpush2.msra.mxu0 0.0
    %93 = vmatprep.subr.mxu0 0.0
    %94 = vmatpush2.msra.mxu0 0.0
    %95 = vmatprep.subr.mxu0 0.0
    %96 = vmatpush2.msra.mxu0 0.0
    %97 = vmatprep.subr.mxu0 0.0
    %98 = vmatpush2.msra.mxu0 0.0
    %99 = vmatprep.subr.mxu0 0.0
    %100 = vmatpush2.msra.mxu0 0.0
    %101 = vmatprep.subr.mxu0 0.0
    %102 = vmatpush2.msra.mxu0 0.0
    %103 = vmatprep.subr.mxu0 0.0
    %104 = vmatpush2.msra.mxu0 0.0
    %105 = vmatprep.subr.mxu0 0.0
    %106 = vmatpush2.msra.mxu0 0.0
    %107 = vmatprep.subr.mxu0 0.0
    %108 = vmatpush2.msra.mxu0 0.0
    %109 = vmatprep.subr.mxu0 0.0
    %110 = vmatpush2.msra.mxu0 0.0
    %111 = vmatprep.subr.mxu0 0.0
    %112 = vmatpush2.msra.mxu0 0.0
    %113 = vmatprep.subr.mxu0 0.0
    %114 = vmatpush2.msra.mxu0 0.0
    %115 = vmatprep.subr.mxu0 0.0
    %116 = vmatpush2.msra.mxu0 0.0
    %117 = vmatprep.mubr.f32.mxu0 0.0
    %118 = vmatmul.mubr.f32.gmra.mxu0 %v29
    %v119 = vpop.f32.mrf.mxu0
    %v120 = vadd.f32 %v51, %v119
    %v121 = vpop.f32.mrf.mxu0
    %122 = vdwg.mxu0
    %v123 = vmax.f32 %v120, 0.0
    %124 = vst [vmem:[#allocation5] sm:$0xff] %v123
    // Predicated region
    $region18: #{_fc_layer_impl.1} parent=1 // pred_check
      _
    $region19: #{_fc_layer_impl.1} parent=1 // pred_check_branch
      %126 = sbr.rel (0) target = $region21
    $region20: #{_fc_layer_impl.1} parent=1 // pred_region
      %s128 = ssub.s32 128, 128
      %129 = vsyncadd [#allocation4], %s128
      %s131 = sshll.u32 [#allocation5], 4
      %s132 = int_to_ptr.vmem [resolvable:$true] %s131
      %134 = dma.vmem_to_hbm [thread:$0]  %s132, 128, %s3, [#allocation4]
    $region21: #{_fc_layer_impl.1} parent=1 // pred_fallthru
      _
    // Predicated region
    $region22: #{_fc_layer_impl.1} parent=1 // pred_check
      _
    $region23: #{_fc_layer_impl.1} parent=1 // pred_check_branch
      %136 = sbr.rel (0) target = $region25
    $region24: #{_fc_layer_impl.1} parent=1 // pred_region
      %137 = dma.done [#allocation4], 128
    $region25: #{_fc_layer_impl.1} parent=1 // pred_fallthru
      _
    %138 = vsyncpa [#allocation3], 1
    %139 = vsyncpa [#allocation4], 1

</llo_original>
